<compile_context>
chip_gen: v7x
topology: tpu7x:2x2x1
jax: 0.10.0
libtpu: 0.0.40
codegen_flags: <defaults>
</compile_context>

<pallas_src>
import jax
import jax.numpy as jnp
from jax.experimental import pallas as pl
from jax.experimental.pallas import tpu as pltpu


def _round_up(n, m):
    return ((n + m - 1) // m) * m


def encoder_kernel(x_ref, w1_ref, b1_ref, w2_ref, b2_ref, wh_ref, bh_ref, out_ref):
    # fc1 + relu  (MXU matmul, f32 accumulation)
    h1 = jnp.dot(x_ref[...], w1_ref[...],
                 preferred_element_type=jnp.float32) + b1_ref[...]
    h1 = jnp.maximum(h1, 0.0)

    # fc2 + relu
    h2 = jnp.dot(h1, w2_ref[...],
                 preferred_element_type=jnp.float32) + b2_ref[...]
    h2 = jnp.maximum(h2, 0.0)

    # fused heads: columns [0:L) = mu, [L:2L) = logvar -> single matmul + store
    out_ref[...] = (jnp.dot(h2, wh_ref[...],
                            preferred_element_type=jnp.float32)
                    + bh_ref[...]).astype(out_ref.dtype)


def encoder_forward(x, fused_params, *, tile_b=2048):
    """x: (B, input_size) f32. fused_params: dict with w1,b1,w2,b2,wh,bh.
    Returns (mu, logvar), each (B, latent_dim)."""
    p = fused_params
    B, in_size = x.shape
    h1_dim = p["w1"].shape[1]
    h2_dim = p["w2"].shape[1]
    two_l = p["wh"].shape[1]
    latent_dim = two_l // 2

    # ---- batch tile selection -------------------------------------------
    # Multiple of 8 rows (sublane alignment). Aim for >= 2 grid steps when the
    # batch allows it so both TensorCores get work on v7x; big batches are
    # capped at `tile_b` (overhead-amortized, well under VMEM limits).
    B8 = _round_up(B, 8)
    if B8 >= 16:
        max_tile = _round_up(pl.cdiv(B8, 2), 8)   # at least 2 tiles
    else:
        max_tile = 8
    TILE_B = min(_round_up(tile_b, 8), max_tile)
    num_tiles = pl.cdiv(B, TILE_B)                # ragged last block handled by Pallas

    weight_bytes = 4 * (p["w1"].size + p["b1"].size + p["w2"].size
                        + p["b2"].size + p["wh"].size + p["bh"].size)
    cost = pl.CostEstimate(
        flops=2 * B * (in_size * h1_dim + h1_dim * h2_dim + h2_dim * two_l),
        transcendentals=0,
        bytes_accessed=B * in_size * 4 + B * two_l * 4 + weight_bytes,
    )

    resident = lambda i: (0, 0)   # weights/biases: same block every grid step

    out = pl.pallas_call(
        encoder_kernel,
        out_shape=jax.ShapeDtypeStruct((B, two_l), jnp.float32),
        grid=(num_tiles,),
        in_specs=[
            pl.BlockSpec((TILE_B, in_size), lambda i: (i, 0)),   # x: pipelined
            pl.BlockSpec((in_size, h1_dim), resident),           # w1
            pl.BlockSpec((1, h1_dim), resident),                 # b1
            pl.BlockSpec((h1_dim, h2_dim), resident),            # w2
            pl.BlockSpec((1, h2_dim), resident),                 # b2
            pl.BlockSpec((h2_dim, two_l), resident),             # fused head W
            pl.BlockSpec((1, two_l), resident),                  # fused head b
        ],
        out_specs=pl.BlockSpec((TILE_B, two_l), lambda i: (i, 0)),
        compiler_params=pltpu.CompilerParams(
            dimension_semantics=("parallel",),        # megacore-shard batch tiles
            vmem_limit_bytes=32 * 1024 * 1024,        # safe on v5e/v6e/v7x
        ),
        cost_estimate=cost,
    )(x, p["w1"], p["b1"], p["w2"], p["b2"], p["wh"], p["bh"])

    mu = out[:, :latent_dim]
    logvar = out[:, latent_dim:]
    return mu, logvar


def init_params(key, input_size=140, latent_dim=8):
    """Deterministic init matching the PyTorch module's layer shapes.
    Weights stored (in, out) [i.e. PyTorch W.T]; biases stored (1, out)."""
    def linear(k, fan_in, fan_out):
        kw, kb = jax.random.split(k)
        bound = 1.0 / jnp.sqrt(fan_in)
        w = jax.random.uniform(kw, (fan_in, fan_out), jnp.float32, -bound, bound)
        b = jax.random.uniform(kb, (1, fan_out), jnp.float32, -bound, bound)
        return w, b

    k1, k2, k3, k4 = jax.random.split(key, 4)
    w1, b1 = linear(k1, input_size, 32)
    w2, b2 = linear(k2, 32, 16)
    wmu, bmu = linear(k3, 16, latent_dim)
    wlv, blv = linear(k4, 16, latent_dim)
    return dict(w1=w1, b1=b1, w2=w2, b2=b2, wmu=wmu, bmu=bmu, wlv=wlv, blv=blv)


def fuse_head_params(params):
    """One-time param prep: fuse mu/logvar heads into a single (16, 2L) linear."""
    fused = dict(w1=params["w1"], b1=params["b1"],
                 w2=params["w2"], b2=params["b2"],
                 wh=jnp.concatenate([params["wmu"], params["wlv"]], axis=1),
                 bh=jnp.concatenate([params["bmu"], params["blv"]], axis=1))
    return jax.tree_util.tree_map(jnp.asarray, fused)


def encoder_ref(x, p):
    """Pure-JAX reference for correctness checking (unfused heads)."""
    h1 = jnp.maximum(x @ p["w1"] + p["b1"], 0.0)
    h2 = jnp.maximum(h1 @ p["w2"] + p["b2"], 0.0)
    return h2 @ p["wmu"] + p["bmu"], h2 @ p["wlv"] + p["blv"]


if __name__ == "__main__":
    key = jax.random.PRNGKey(0)
    kx, kx2, kp = jax.random.split(key, 3)

    input_size, latent_dim = 140, 8
    params = init_params(kp, input_size=input_size, latent_dim=latent_dim)
    fused_params = fuse_head_params(params)   # hoisted out of the forward path

    # Case 1: small, sublane-aligned batch (single tile).
    batch = 8
    x = jax.random.normal(kx, (batch, input_size), jnp.float32)
    mu, logvar = encoder_forward(x, fused_params)
    jax.block_until_ready((mu, logvar))
    mu_ref, logvar_ref = encoder_ref(x, params)
    assert mu.shape == (batch, latent_dim) and logvar.shape == (batch, latent_dim)
    assert jnp.allclose(mu, mu_ref, atol=1e-5, rtol=1e-5)
    assert jnp.allclose(logvar, logvar_ref, atol=1e-5, rtol=1e-5)

    # Case 2: batch not a multiple of 8 -> exercises the ragged last block
    # (no wrapper-side padding copy of x) and the >=2-tile split.
    batch2 = 13
    x2 = jax.random.normal(kx2, (batch2, input_size), jnp.float32)
    mu2, logvar2 = encoder_forward(x2, fused_params)
    jax.block_until_ready((mu2, logvar2))
    mu2_ref, logvar2_ref = encoder_ref(x2, params)
    assert mu2.shape == (batch2, latent_dim) and logvar2.shape == (batch2, latent_dim)
    assert jnp.allclose(mu2, mu2_ref, atol=1e-5, rtol=1e-5)
    assert jnp.allclose(logvar2, logvar2_ref, atol=1e-5, rtol=1e-5)

    print("KERNEL_OK")
</pallas_src>

<mosaic_0001>
module attributes {stable_mosaic.version = 11 : i64} {
  func.func @encoder_kernel(%arg0: i32, %arg1: memref<8x140xf32, #tpu.memory_space<vmem>>, %arg2: memref<140x32xf32, #tpu.memory_space<vmem>>, %arg3: memref<1x32xf32, #tpu.memory_space<vmem>>, %arg4: memref<32x16xf32, #tpu.memory_space<vmem>>, %arg5: memref<1x16xf32, #tpu.memory_space<vmem>>, %arg6: memref<16x16xf32, #tpu.memory_space<vmem>>, %arg7: memref<1x16xf32, #tpu.memory_space<vmem>>, %arg8: memref<8x16xf32, #tpu.memory_space<vmem>>) attributes {dimension_semantics = [#tpu.dimension_semantics<parallel>], iteration_bounds = array<i64: 1>, scalar_prefetch = 0 : i64, scratch_operands = 0 : i64, tpu.core_type = #tpu.core_type<tc>, window_params = [{transform_indices = @transform_0, window_bounds = array<i64: 8, 140>}, {pipeline_mode = #tpu.pipeline_mode<synchronous>, transform_indices = @transform_1, window_bounds = array<i64: 140, 32>}, {pipeline_mode = #tpu.pipeline_mode<synchronous>, transform_indices = @transform_2, window_bounds = array<i64: 1, 32>}, {pipeline_mode = #tpu.pipeline_mode<synchronous>, transform_indices = @transform_3, window_bounds = array<i64: 32, 16>}, {pipeline_mode = #tpu.pipeline_mode<synchronous>, transform_indices = @transform_4, window_bounds = array<i64: 1, 16>}, {pipeline_mode = #tpu.pipeline_mode<synchronous>, transform_indices = @transform_5, window_bounds = array<i64: 16, 16>}, {pipeline_mode = #tpu.pipeline_mode<synchronous>, transform_indices = @transform_6, window_bounds = array<i64: 1, 16>}, {transform_indices = @transform_7, window_bounds = array<i64: 8, 16>}]} {
    %c0 = arith.constant 0 : index
    %c0_0 = arith.constant 0 : index
    %0 = vector.load %arg1[%c0, %c0_0] : memref<8x140xf32, #tpu.memory_space<vmem>>, vector<8x140xf32>
    %c0_1 = arith.constant 0 : index
    %c0_2 = arith.constant 0 : index
    %1 = vector.load %arg2[%c0_1, %c0_2] : memref<140x32xf32, #tpu.memory_space<vmem>>, vector<140x32xf32>
    %cst = arith.constant dense<0.000000e+00> : vector<8x32xf32>
    %2 = tpu.matmul %0, %1, %cst {dimension_numbers = #tpu.dot_dimension_numbers<[1], [0], [0], [1], [0, 0, 1, 1], [], []>} : vector<8x140xf32>, vector<140x32xf32>, vector<8x32xf32> -> vector<8x32xf32>
    %c0_3 = arith.constant 0 : index
    %c0_4 = arith.constant 0 : index
    %3 = vector.load %arg3[%c0_3, %c0_4] : memref<1x32xf32, #tpu.memory_space<vmem>>, vector<1x32xf32>
    %4 = vector.broadcast %3 : vector<1x32xf32> to vector<8x32xf32>
    %5 = arith.addf %2, %4 : vector<8x32xf32>
    %cst_5 = arith.constant 0.000000e+00 : f32
    %6 = vector.broadcast %cst_5 : f32 to vector<8x32xf32>
    %7 = arith.maximumf %5, %6 : vector<8x32xf32>
    %c0_6 = arith.constant 0 : index
    %c0_7 = arith.constant 0 : index
    %8 = vector.load %arg4[%c0_6, %c0_7] : memref<32x16xf32, #tpu.memory_space<vmem>>, vector<32x16xf32>
    %cst_8 = arith.constant dense<0.000000e+00> : vector<8x16xf32>
    %9 = tpu.matmul %7, %8, %cst_8 {dimension_numbers = #tpu.dot_dimension_numbers<[1], [0], [0], [1], [0, 0, 1, 1], [], []>} : vector<8x32xf32>, vector<32x16xf32>, vector<8x16xf32> -> vector<8x16xf32>
    %c0_9 = arith.constant 0 : index
    %c0_10 = arith.constant 0 : index
    %10 = vector.load %arg5[%c0_9, %c0_10] : memref<1x16xf32, #tpu.memory_space<vmem>>, vector<1x16xf32>
    %11 = vector.broadcast %10 : vector<1x16xf32> to vector<8x16xf32>
    %12 = arith.addf %9, %11 : vector<8x16xf32>
    %cst_11 = arith.constant 0.000000e+00 : f32
    %13 = vector.broadcast %cst_11 : f32 to vector<8x16xf32>
    %14 = arith.maximumf %12, %13 : vector<8x16xf32>
    %c0_12 = arith.constant 0 : index
    %c0_13 = arith.constant 0 : index
    %15 = vector.load %arg6[%c0_12, %c0_13] : memref<16x16xf32, #tpu.memory_space<vmem>>, vector<16x16xf32>
    %cst_14 = arith.constant dense<0.000000e+00> : vector<8x16xf32>
    %16 = tpu.matmul %14, %15, %cst_14 {dimension_numbers = #tpu.dot_dimension_numbers<[1], [0], [0], [1], [0, 0, 1, 1], [], []>} : vector<8x16xf32>, vector<16x16xf32>, vector<8x16xf32> -> vector<8x16xf32>
    %c0_15 = arith.constant 0 : index
    %c0_16 = arith.constant 0 : index
    %17 = vector.load %arg7[%c0_15, %c0_16] : memref<1x16xf32, #tpu.memory_space<vmem>>, vector<1x16xf32>
    %18 = vector.broadcast %17 : vector<1x16xf32> to vector<8x16xf32>
    %19 = arith.addf %16, %18 : vector<8x16xf32>
    %c0_17 = arith.constant 0 : index
    %c0_18 = arith.constant 0 : index
    %20 = vector.load %arg8[%c0_17, %c0_18] : memref<8x16xf32, #tpu.memory_space<vmem>>, vector<8x16xf32>
    tpu.vector_store %arg8[%c0_17, %c0_18], %19 {strides = array<i32>} : memref<8x16xf32, #tpu.memory_space<vmem>>, vector<8x16xf32>,
    return
  }
  func.func @transform_0(%arg0: i32) -> (i32, i32) {
    %c0_i32 = arith.constant 0 : i32
    %c0_i32_0 = arith.constant 0 : i32
    return %arg0, %c0_i32 : i32, i32
  }
  func.func @transform_1(%arg0: i32) -> (i32, i32) {
    %c0_i32 = arith.constant 0 : i32
    %c0_i32_0 = arith.constant 0 : i32
    %c0_i32_1 = arith.constant 0 : i32
    return %c0_i32, %c0_i32_0 : i32, i32
  }
  func.func @transform_2(%arg0: i32) -> (i32, i32) {
    %c0_i32 = arith.constant 0 : i32
    %c0_i32_0 = arith.constant 0 : i32
    %c0_i32_1 = arith.constant 0 : i32
    return %c0_i32, %c0_i32_0 : i32, i32
  }
  func.func @transform_3(%arg0: i32) -> (i32, i32) {
    %c0_i32 = arith.constant 0 : i32
    %c0_i32_0 = arith.constant 0 : i32
    %c0_i32_1 = arith.constant 0 : i32
    return %c0_i32, %c0_i32_0 : i32, i32
  }
  func.func @transform_4(%arg0: i32) -> (i32, i32) {
    %c0_i32 = arith.constant 0 : i32
    %c0_i32_0 = arith.constant 0 : i32
    %c0_i32_1 = arith.constant 0 : i32
    return %c0_i32, %c0_i32_0 : i32, i32
  }
  func.func @transform_5(%arg0: i32) -> (i32, i32) {
    %c0_i32 = arith.constant 0 : i32
    %c0_i32_0 = arith.constant 0 : i32
    %c0_i32_1 = arith.constant 0 : i32
    return %c0_i32, %c0_i32_0 : i32, i32
  }
  func.func @transform_6(%arg0: i32) -> (i32, i32) {
    %c0_i32 = arith.constant 0 : i32
    %c0_i32_0 = arith.constant 0 : i32
    %c0_i32_1 = arith.constant 0 : i32
    return %c0_i32, %c0_i32_0 : i32, i32
  }
  func.func @transform_7(%arg0: i32) -> (i32, i32) {
    %c0_i32 = arith.constant 0 : i32
    %c0_i32_0 = arith.constant 0 : i32
    return %arg0, %c0_i32 : i32, i32
  }
}

</mosaic_0001>

<llo_original>
// kernel: tpu_custom_call.1
$region0: #{tpu_custom_call.1}
  #allocation0 [shape = 'u32[]', space=smem, size = 0x4, offset = 0x4, fixed_abs, tag = 'smem constant byte address 0x4 - core index']
  #allocation1 [shape = 'u32[144,128]{1,0:T(1,128)}', space=vmem, size = 0x12000, scoped, tag = 'internal scratch']
  %s0 = inlined_call_operand.vmem [shape: f32[8,140], index: 0, kind: input, shape index: {}]
  %s1 = inlined_call_operand.vmem [shape: f32[140,32], index: 1, kind: input, shape index: {}]
  %s2 = inlined_call_operand.vmem [shape: f32[1,32], index: 2, kind: input, shape index: {}]
  %s3 = inlined_call_operand.vmem [shape: f32[32,16], index: 3, kind: input, shape index: {}]
  %s4 = inlined_call_operand.vmem [shape: f32[1,16], index: 4, kind: input, shape index: {}]
  %s5 = inlined_call_operand.vmem [shape: f32[16,16], index: 5, kind: input, shape index: {}]
  %s6 = inlined_call_operand.vmem [shape: f32[1,16], index: 6, kind: input, shape index: {}]
  %s7 = inlined_call_operand.hbm [shape: f32[8,16], index: 7, kind: output, shape index: {}]
  %s8 = sld [smem:[#allocation0]]
  $region38: #{tpu_custom_call.1} parent=0
    _
  %s10 = ssub.s32 1, %s8
  %s11 = scalar_select 0, %s10, %s8
  $region1: #{tpu_custom_call.1} parent=0
    #allocation2 [shape = 'u8[4096]{0}', space=vmem, size = 0x1000, scoped, tag = 'output window, operand 0, single buffered']
    #allocation3 [shape = 's32[1]{0}', space=sflag, size = 0x4, scoped, tag = 'scoped memory for tpu_custom_call.1']
    %12 = vsyncpa [#allocation3], 0
    // Predicated region
    $region2: #{tpu_custom_call.1} parent=1 // pred_check
      _
    $region3: #{tpu_custom_call.1} parent=1 // pred_check_branch
      %14 = sbr.rel (0) target = $region5
    $region4: #{tpu_custom_call.1} parent=1 // pred_region
      _
    $region5: #{tpu_custom_call.1} parent=1 // pred_fallthru
      _
    // Predicated region
    $region6: #{tpu_custom_call.1} parent=1 // pred_check
      _
    $region7: #{tpu_custom_call.1} parent=1 // pred_check_branch
      %16 = sbr.rel (0) target = $region9
    $region8: #{tpu_custom_call.1} parent=1 // pred_region
      _
    $region9: #{tpu_custom_call.1} parent=1 // pred_fallthru
      _
    // Predicated region
    $region10: #{tpu_custom_call.1} parent=1 // pred_check
      _
    $region11: #{tpu_custom_call.1} parent=1 // pred_check_branch
      %18 = sbr.rel (0) target = $region13
    $region12: #{tpu_custom_call.1} parent=1 // pred_region
      _
    $region13: #{tpu_custom_call.1} parent=1 // pred_fallthru
      _
    // Predicated region
    $region14: #{tpu_custom_call.1} parent=1 // pred_check
      _
    $region15: #{tpu_custom_call.1} parent=1 // pred_check_branch
      %20 = sbr.rel (0) target = $region17
    $region16: #{tpu_custom_call.1} parent=1 // pred_region
      _
    $region17: #{tpu_custom_call.1} parent=1 // pred_fallthru
      _
    // Predicated region
    $region18: #{tpu_custom_call.1} parent=1 // pred_check
      _
    $region19: #{tpu_custom_call.1} parent=1 // pred_check_branch
      %22 = sbr.rel (0) target = $region21
    $region20: #{tpu_custom_call.1} parent=1 // pred_region
      _
    $region21: #{tpu_custom_call.1} parent=1 // pred_fallthru
      _
    // Predicated region
    $region22: #{tpu_custom_call.1} parent=1 // pred_check
      _
    $region23: #{tpu_custom_call.1} parent=1 // pred_check_branch
      %24 = sbr.rel (0) target = $region25
    $region24: #{tpu_custom_call.1} parent=1 // pred_region
      _
    $region25: #{tpu_custom_call.1} parent=1 // pred_fallthru
      _
    // Predicated region
    $region26: #{tpu_custom_call.1} parent=1 // pred_check
      _
    $region27: #{tpu_custom_call.1} parent=1 // pred_check_branch
      %26 = sbr.rel (0) target = $region29
    $region28: #{tpu_custom_call.1} parent=1 // pred_region
      _
    $region29: #{tpu_custom_call.1} parent=1 // pred_fallthru
      _
    %v27 = vld [vmem:[%s0] sm:$0xff]
    %v28 = vld [vmem:[%s0 + $0x8] sm:$0xff]
    %v29 = vld [vmem:[%s1] sm:$0xff]
    %v30 = vld [vmem:[%s1 + $0x8] sm:$0xff]
    %v31 = vld [vmem:[%s1 + $0x10] sm:$0xff]
    %v32 = vld [vmem:[%s1 + $0x18] sm:$0xff]
    %v33 = vld [vmem:[%s1 + $0x20] sm:$0xff]
    %v34 = vld [vmem:[%s1 + $0x28] sm:$0xff]
    %v35 = vld [vmem:[%s1 + $0x30] sm:$0xff]
    %v36 = vld [vmem:[%s1 + $0x38] sm:$0xff]
    %v37 = vld [vmem:[%s1 + $0x40] sm:$0xff]
    %v38 = vld [vmem:[%s1 + $0x48] sm:$0xff]
    %v39 = vld [vmem:[%s1 + $0x50] sm:$0xff]
    %v40 = vld [vmem:[%s1 + $0x58] sm:$0xff]
    %v41 = vld [vmem:[%s1 + $0x60] sm:$0xff]
    %v42 = vld [vmem:[%s1 + $0x68] sm:$0xff]
    %v43 = vld [vmem:[%s1 + $0x70] sm:$0xff]
    %v44 = vld [vmem:[%s1 + $0x78] sm:$0xff]
    %v45 = vld [vmem:[%s1 + $0x80] sm:$0xff]
    %v46 = vld [vmem:[%s1 + $0x88] sm:$0xf]
    %v47 = vld [vmem:[%s2] sm:$0x1]
    %v49 = vlaneseq
    %v50 = vshrl.u32 %v49, 7
    %v51 = vsub.s32 0, %v50
    %v52 = vrot.slane %v47, %v51
    %vm54 = vcmask 97280
    %v56 = vsel %vm54, %v28, 0
    %vm58 = vcmask 1043456
    %v60 = vsel %vm58, %v46, 0
    %62 = vmatprep.subr.mxu0 0.0
    %63 = vmatpush1.msra.mxu0 %v29
    %64 = vmatprep.subr.mxu0 0.0
    %65 = vmatpush1.msra.mxu0 %v30
    %66 = vmatprep.subr.mxu0 0.0
    %67 = vmatpush1.msra.mxu0 %v31
    %68 = vmatprep.subr.mxu0 0.0
    %69 = vmatpush1.msra.mxu0 %v32
    %70 = vmatprep.subr.mxu0 0.0
    %71 = vmatpush1.msra.mxu0 %v33
    %72 = vmatprep.subr.mxu0 0.0
    %73 = vmatpush1.msra.mxu0 %v34
    %74 = vmatprep.subr.mxu0 0.0
    %75 = vmatpush1.msra.mxu0 %v35
    %76 = vmatprep.subr.mxu0 0.0
    %77 = vmatpush1.msra.mxu0 %v36
    %78 = vmatprep.subr.mxu0 0.0
    %79 = vmatpush1.msra.mxu0 %v37
    %80 = vmatprep.subr.mxu0 0.0
    %81 = vmatpush1.msra.mxu0 %v38
    %82 = vmatprep.subr.mxu0 0.0
    %83 = vmatpush1.msra.mxu0 %v39
    %84 = vmatprep.subr.mxu0 0.0
    %85 = vmatpush1.msra.mxu0 %v40
    %86 = vmatprep.subr.mxu0 0.0
    %87 = vmatpush1.msra.mxu0 %v41
    %88 = vmatprep.subr.mxu0 0.0
    %89 = vmatpush1.msra.mxu0 %v42
    %90 = vmatprep.subr.mxu0 0.0
    %91 = vmatpush1.msra.mxu0 %v43
    %92 = vmatprep.subr.mxu0 0.0
    %93 = vmatpush1.msra.mxu0 %v44
    %94 = vmatprep.subr.mxu0 0.0
    %95 = vmatpush1.msra.mxu0 %v45
    %96 = vmatprep.subr.mxu0 0.0
    %97 = vmatpush1.msra.mxu0 %v60
    %98 = vmatprep.subr.mxu0 0.0
    %99 = vmatpush1.msra.mxu0 0.0
    %100 = vmatprep.subr.mxu0 0.0
    %101 = vmatpush1.msra.mxu0 0.0
    %102 = vmatprep.subr.mxu0 0.0
    %103 = vmatpush1.msra.mxu0 0.0
    %104 = vmatprep.subr.mxu0 0.0
    %105 = vmatpush1.msra.mxu0 0.0
    %106 = vmatprep.subr.mxu0 0.0
    %107 = vmatpush1.msra.mxu0 0.0
    %108 = vmatprep.subr.mxu0 0.0
    %109 = vmatpush1.msra.mxu0 0.0
    %110 = vmatprep.subr.mxu0 0.0
    %111 = vmatpush1.msra.mxu0 0.0
    %112 = vmatprep.subr.mxu0 0.0
    %113 = vmatpush1.msra.mxu0 0.0
    %114 = vmatprep.subr.mxu0 0.0
    %115 = vmatpush1.msra.mxu0 0.0
    %116 = vmatprep.subr.mxu0 0.0
    %117 = vmatpush1.msra.mxu0 0.0
    %118 = vmatprep.subr.mxu0 0.0
    %119 = vmatpush1.msra.mxu0 0.0
    %120 = vmatprep.subr.mxu0 0.0
    %121 = vmatpush1.msra.mxu0 0.0
    %122 = vmatprep.subr.mxu0 0.0
    %123 = vmatpush1.msra.mxu0 0.0
    %124 = vmatprep.subr.mxu0 0.0
    %125 = vmatpush1.msra.mxu0 0.0
    %126 = vmatprep.mubr.f32.mxu0 %v56
    %127 = vmatmul.mubr.f32.gmra.mrb[0].mxu0 %v27
    %v128 = vpop.f32.mrb[0].mxu0
    %v129 = vadd.f32 %v52, %v128
    %v130 = vpop.f32.mrb[0].mxu0
    %131 = vdwg.mxu0
    %v132 = vmax.f32 %v129, 0.0
    %v133 = vld [vmem:[%s3] sm:$0xff]
    %v134 = vld [vmem:[%s3 + $0x8] sm:$0xff]
    %v135 = vld [vmem:[%s3 + $0x10] sm:$0xff]
    %v136 = vld [vmem:[%s3 + $0x18] sm:$0xff]
    %v137 = vld [vmem:[%s4] sm:$0x1]
    %v139 = vlaneseq
    %v140 = vshrl.u32 %v139, 7
    %v141 = vsub.s32 0, %v140
    %v142 = vrot.slane %v137, %v141
    %vm144 = vcmask 261120
    %v146 = vsel %vm144, %v132, 0
    %148 = vmatprep.subr.mxu0 0.0
    %149 = vmatpush1.msra.mxu0 %v133
    %150 = vmatprep.subr.mxu0 0.0
    %151 = vmatpush1.msra.mxu0 %v134
    %152 = vmatprep.subr.mxu0 0.0
    %153 = vmatpush1.msra.mxu0 %v135
    %154 = vmatprep.subr.mxu0 0.0
    %155 = vmatpush1.msra.mxu0 %v136
    %156 = vmatprep.subr.mxu0 0.0
    %157 = vmatpush1.msra.mxu0 0.0
    %158 = vmatprep.subr.mxu0 0.0
    %159 = vmatpush1.msra.mxu0 0.0
    %160 = vmatprep.subr.mxu0 0.0
    %161 = vmatpush1.msra.mxu0 0.0
    %162 = vmatprep.subr.mxu0 0.0
    %163 = vmatpush1.msra.mxu0 0.0
    %164 = vmatprep.subr.mxu0 0.0
    %165 = vmatpush1.msra.mxu0 0.0
    %166 = vmatprep.subr.mxu0 0.0
    %167 = vmatpush1.msra.mxu0 0.0
    %168 = vmatprep.subr.mxu0 0.0
    %169 = vmatpush1.msra.mxu0 0.0
    %170 = vmatprep.subr.mxu0 0.0
    %171 = vmatpush1.msra.mxu0 0.0
    %172 = vmatprep.subr.mxu0 0.0
    %173 = vmatpush1.msra.mxu0 0.0
    %174 = vmatprep.subr.mxu0 0.0
    %175 = vmatpush1.msra.mxu0 0.0
    %176 = vmatprep.subr.mxu0 0.0
    %177 = vmatpush1.msra.mxu0 0.0
    %178 = vmatprep.subr.mxu0 0.0
    %179 = vmatpush1.msra.mxu0 0.0
    %180 = vmatprep.subr.mxu0 0.0
    %181 = vmatpush1.msra.mxu0 0.0
    %182 = vmatprep.subr.mxu0 0.0
    %183 = vmatpush1.msra.mxu0 0.0
    %184 = vmatprep.subr.mxu0 0.0
    %185 = vmatpush1.msra.mxu0 0.0
    %186 = vmatprep.subr.mxu0 0.0
    %187 = vmatpush1.msra.mxu0 0.0
    %188 = vmatprep.subr.mxu0 0.0
    %189 = vmatpush1.msra.mxu0 0.0
    %190 = vmatprep.subr.mxu0 0.0
    %191 = vmatpush1.msra.mxu0 0.0
    %192 = vmatprep.subr.mxu0 0.0
    %193 = vmatpush1.msra.mxu0 0.0
    %194 = vmatprep.subr.mxu0 0.0
    %195 = vmatpush1.msra.mxu0 0.0
    %196 = vmatprep.subr.mxu0 0.0
    %197 = vmatpush1.msra.mxu0 0.0
    %198 = vmatprep.subr.mxu0 0.0
    %199 = vmatpush1.msra.mxu0 0.0
    %200 = vmatprep.subr.mxu0 0.0
    %201 = vmatpush1.msra.mxu0 0.0
    %202 = vmatprep.subr.mxu0 0.0
    %203 = vmatpush1.msra.mxu0 0.0
    %204 = vmatprep.subr.mxu0 0.0
    %205 = vmatpush1.msra.mxu0 0.0
    %206 = vmatprep.subr.mxu0 0.0
    %207 = vmatpush1.msra.mxu0 0.0
    %208 = vmatprep.subr.mxu0 0.0
    %209 = vmatpush1.msra.mxu0 0.0
    %210 = vmatprep.subr.mxu0 0.0
    %211 = vmatpush1.msra.mxu0 0.0
    %212 = vmatprep.mubr.f32.mxu0 0.0
    %213 = vmatmul.mubr.f32.gmra.mrb[0].mxu0 %v146
    %v214 = vpop.f32.mrb[0].mxu0
    %v215 = vadd.f32 %v142, %v214
    %v216 = vpop.f32.mrb[0].mxu0
    %217 = vdwg.mxu0
    %v218 = vmax.f32 %v215, 0.0
    %v219 = vld [vmem:[%s5] sm:$0xff]
    %v220 = vld [vmem:[%s5 + $0x8] sm:$0xff]
    %v221 = vld [vmem:[%s6] sm:$0x1]
    %v223 = vlaneseq
    %v224 = vshrl.u32 %v223, 7
    %v225 = vsub.s32 0, %v224
    %v226 = vrot.slane %v221, %v225
    %vm228 = vcmask 130048
    %v230 = vsel %vm228, %v218, 0
    %232 = vmatprep.subr.mxu0 0.0
    %233 = vmatpush1.msra.mxu0 %v219
    %234 = vmatprep.subr.mxu0 0.0
    %235 = vmatpush1.msra.mxu0 %v220
    %236 = vmatprep.subr.mxu0 0.0
    %237 = vmatpush1.msra.mxu0 0.0
    %238 = vmatprep.subr.mxu0 0.0
    %239 = vmatpush1.msra.mxu0 0.0
    %240 = vmatprep.subr.mxu0 0.0
    %241 = vmatpush1.msra.mxu0 0.0
    %242 = vmatprep.subr.mxu0 0.0
    %243 = vmatpush1.msra.mxu0 0.0
    %244 = vmatprep.subr.mxu0 0.0
    %245 = vmatpush1.msra.mxu0 0.0
    %246 = vmatprep.subr.mxu0 0.0
    %247 = vmatpush1.msra.mxu0 0.0
    %248 = vmatprep.subr.mxu0 0.0
    %249 = vmatpush1.msra.mxu0 0.0
    %250 = vmatprep.subr.mxu0 0.0
    %251 = vmatpush1.msra.mxu0 0.0
    %252 = vmatprep.subr.mxu0 0.0
    %253 = vmatpush1.msra.mxu0 0.0
    %254 = vmatprep.subr.mxu0 0.0
    %255 = vmatpush1.msra.mxu0 0.0
    %256 = vmatprep.subr.mxu0 0.0
    %257 = vmatpush1.msra.mxu0 0.0
    %258 = vmatprep.subr.mxu0 0.0
    %259 = vmatpush1.msra.mxu0 0.0
    %260 = vmatprep.subr.mxu0 0.0
    %261 = vmatpush1.msra.mxu0 0.0
    %262 = vmatprep.subr.mxu0 0.0
    %263 = vmatpush1.msra.mxu0 0.0
    %264 = vmatprep.subr.mxu0 0.0
    %265 = vmatpush1.msra.mxu0 0.0
    %266 = vmatprep.subr.mxu0 0.0
    %267 = vmatpush1.msra.mxu0 0.0
    %268 = vmatprep.subr.mxu0 0.0
    %269 = vmatpush1.msra.mxu0 0.0
    %270 = vmatprep.subr.mxu0 0.0
    %271 = vmatpush1.msra.mxu0 0.0
    %272 = vmatprep.subr.mxu0 0.0
    %273 = vmatpush1.msra.mxu0 0.0
    %274 = vmatprep.subr.mxu0 0.0
    %275 = vmatpush1.msra.mxu0 0.0
    %276 = vmatprep.subr.mxu0 0.0
    %277 = vmatpush1.msra.mxu0 0.0
    %278 = vmatprep.subr.mxu0 0.0
    %279 = vmatpush1.msra.mxu0 0.0
    %280 = vmatprep.subr.mxu0 0.0
    %281 = vmatpush1.msra.mxu0 0.0
    %282 = vmatprep.subr.mxu0 0.0
    %283 = vmatpush1.msra.mxu0 0.0
    %284 = vmatprep.subr.mxu0 0.0
    %285 = vmatpush1.msra.mxu0 0.0
    %286 = vmatprep.subr.mxu0 0.0
    %287 = vmatpush1.msra.mxu0 0.0
    %288 = vmatprep.subr.mxu0 0.0
    %289 = vmatpush1.msra.mxu0 0.0
    %290 = vmatprep.subr.mxu0 0.0
    %291 = vmatpush1.msra.mxu0 0.0
    %292 = vmatprep.subr.mxu0 0.0
    %293 = vmatpush1.msra.mxu0 0.0
    %294 = vmatprep.subr.mxu0 0.0
    %295 = vmatpush1.msra.mxu0 0.0
    %296 = vmatprep.mubr.f32.mxu0 0.0
    %297 = vmatmul.mubr.f32.gmra.mrb[0].mxu0 %v230
    %v298 = vpop.f32.mrb[0].mxu0
    %v299 = vadd.f32 %v226, %v298
    %v300 = vpop.f32.mrb[0].mxu0
    %301 = vdwg.mxu0
    %302 = vst.msk [vmem:[#allocation2] sm:$0xff] %vm228, %v299
    // Predicated region
    $region30: #{tpu_custom_call.1} parent=1 // pred_check
      _
    $region31: #{tpu_custom_call.1} parent=1 // pred_check_branch
      %304 = sbr.rel (0) target = $region33
    $region32: #{tpu_custom_call.1} parent=1 // pred_region
      %s306 = ssub.s32 128, 128
      %307 = vsyncadd [#allocation3], %s306
      %s309 = sshll.u32 [#allocation2], 4
      %s310 = int_to_ptr.vmem [resolvable:$true] %s309
      %312 = dma.vmem_to_hbm [thread:$0]  %s310, 128, %s7, [#allocation3]
    $region33: #{tpu_custom_call.1} parent=1 // pred_fallthru
      _
    // Predicated region
    $region34: #{tpu_custom_call.1} parent=1 // pred_check
      _
    $region35: #{tpu_custom_call.1} parent=1 // pred_check_branch
      %314 = sbr.rel (0) target = $region37
    $region36: #{tpu_custom_call.1} parent=1 // pred_region
      %315 = dma.done [#allocation3], 128
    $region37: #{tpu_custom_call.1} parent=1 // pred_fallthru
      _
    %316 = vsyncpa [#allocation3], 1

</llo_original>
